<compile_context>
chip_gen: v5e
topology: v5e:2x2
jax: 0.10.0
libtpu: 0.0.40
codegen_flags: <defaults>
</compile_context>

<pallas_src>
import functools

import numpy as np
import jax
import jax.numpy as jnp
from jax import lax
from jax.experimental import pallas as pl
from jax.experimental.pallas import tpu as pltpu

_NEG = -1e9  # padding fill for logits (exp() underflows to 0, no inf/NaN)


def _round_up(x, m):
    return ((x + m - 1) // m) * m


# ----------------------------------------------------------------------------
# Pallas kernel 1: matcher cost matrix
#   cost[q, t] = -( w_rel       * softmax(rel)[q, gold_rel[t]]
#                 + w_head / 2  * (softmax(hs)[q, ghs[t]] + softmax(he)[q, ghe[t]])
#                 + w_tail / 2  * (softmax(ts)[q, gts[t]] + softmax(te)[q, gte[t]]) )
# Implemented as ONE bf16 MXU matmul:  concat(weighted softmaxes) @ stacked one-hot.
# ----------------------------------------------------------------------------
def _cost_kernel(rel_ref, hs_ref, he_ref, ts_ref, te_ref, oh_ref, cost_ref,
                 *, w_rel, w_head, w_tail):
    def softmax(ref):
        x = ref[...].astype(jnp.float32)          # upcast in-kernel (VPU math in f32)
        m = jnp.max(x, axis=-1, keepdims=True)
        e = jnp.exp(x - m)
        return e / jnp.sum(e, axis=-1, keepdims=True)

    # All pieces are padded to 128-lane multiples -> aligned lane concat.
    p = jnp.concatenate(
        [w_rel * softmax(rel_ref),
         (0.5 * w_head) * softmax(hs_ref),
         (0.5 * w_head) * softmax(he_ref),
         (0.5 * w_tail) * softmax(ts_ref),
         (0.5 * w_tail) * softmax(te_ref)],
        axis=-1).astype(jnp.bfloat16)

    # [TILE_N, C1p+4*Sp] @ [C1p+4*Sp, T_pad] -> [TILE_N, T_pad], f32 accumulate.
    cost_ref[...] = -jnp.dot(p, oh_ref[...], preferred_element_type=jnp.float32)


def compute_cost_matrix(rel, hs, he, ts, te, oh_stacked,
                        w_rel, w_head, w_tail, tile_n):
    n_pad, c1p = rel.shape
    sp = hs.shape[1]
    t_pad = oh_stacked.shape[1]
    kernel = functools.partial(_cost_kernel, w_rel=float(w_rel),
                               w_head=float(w_head), w_tail=float(w_tail))
    row_c = pl.BlockSpec((tile_n, c1p), lambda i: (i, 0))
    row_s = pl.BlockSpec((tile_n, sp), lambda i: (i, 0))
    return pl.pallas_call(
        kernel,
        out_shape=jax.ShapeDtypeStruct((n_pad, t_pad), jnp.float32),
        grid=(n_pad // tile_n,),
        in_specs=[row_c, row_s, row_s, row_s, row_s,
                  pl.BlockSpec(oh_stacked.shape, lambda i: (0, 0))],
        out_specs=pl.BlockSpec((tile_n, t_pad), lambda i: (i, 0)),
        compiler_params=pltpu.CompilerParams(
            dimension_semantics=("parallel",)),     # rowwise: megacore-shardable
    )(rel, hs, he, ts, te, oh_stacked)


# ----------------------------------------------------------------------------
# Pallas kernel 2: fused losses (1 relation weighted-CE + 4 entity CEs).
# Gather masks are built in-kernel from int32 targets (iota compare); padded
# rows carry target=-1 and contribute nothing.  Emits all 5 loss scalars in a
# single lane-dense (1, 128) block (lanes 0..4).
# ----------------------------------------------------------------------------
def _fused_ce_kernel(rel_ref, rel_tgt_ref, rel_wv_ref, ent_ref, ent_tgt_ref,
                     out_ref, *, m_pad):
    # ---- relation: class-weighted cross-entropy over all B*Q rows ----
    x = rel_ref[...].astype(jnp.float32)                       # [N, C]
    n, c = x.shape
    mx = jnp.max(x, axis=-1, keepdims=True)
    lse = jnp.log(jnp.sum(jnp.exp(x - mx), axis=-1, keepdims=True)) + mx   # [N,1]
    cls = lax.broadcasted_iota(jnp.int32, (n, c), 1)
    w_oh = jnp.where(cls == rel_tgt_ref[...], rel_wv_ref[...], 0.0)        # [N,C]
    w = jnp.sum(w_oh, axis=-1, keepdims=True)                              # [N,1]
    picked_w = jnp.sum(x * w_oh, axis=-1, keepdims=True)                   # [N,1]
    rel_num = jnp.sum(w * lse - picked_w, keepdims=True)                   # (1,1)
    rel_den = jnp.sum(w, keepdims=True)                                    # (1,1)
    rel_loss = rel_num / jnp.maximum(rel_den, 1e-12)

    # ---- entities: 4 stacked groups of m_pad rows, plain mean CE each ----
    y = ent_ref[...].astype(jnp.float32)                       # [4*m_pad, S]
    r, s = y.shape
    my = jnp.max(y, axis=-1, keepdims=True)
    lse_y = jnp.log(jnp.sum(jnp.exp(y - my), axis=-1, keepdims=True)) + my
    pos = lax.broadcasted_iota(jnp.int32, (r, s), 1)
    msk = (pos == ent_tgt_ref[...]).astype(jnp.float32)        # padded rows -> all-zero
    valid = jnp.sum(msk, axis=-1, keepdims=True)               # 1 real / 0 pad
    pick = jnp.sum(y * msk, axis=-1, keepdims=True)
    contrib = valid * lse_y - pick                              # [4*m_pad, 1]
    gid = lax.broadcasted_iota(jnp.int32, (r, 1), 0) // m_pad

    losses = [rel_loss]
    for g in range(4):
        sel = (gid == g).astype(jnp.float32)
        num_g = jnp.sum(sel * contrib, keepdims=True)
        den_g = jnp.sum(sel * valid, keepdims=True)
        losses.append(num_g / jnp.maximum(den_g, 1.0))

    lane = lax.broadcasted_iota(jnp.int32, (1, 128), 1)
    out = jnp.zeros((1, 128), jnp.float32)
    for i, v in enumerate(losses):
        out = jnp.where(lane == i, v, out)
    out_ref[...] = out


def fused_set_losses(rel_logits, rel_tgt, rel_wv, ent_logits, ent_tgt, m_pad):
    vmem = pl.BlockSpec(memory_space=pltpu.MemorySpace.VMEM)
    kernel = functools.partial(_fused_ce_kernel, m_pad=int(m_pad))
    # TODO(synk): at production N/S sizes, add a row grid with running
    # accumulators (pl.when init/finalize) instead of whole-array VMEM residency.
    return pl.pallas_call(
        kernel,
        out_shape=jax.ShapeDtypeStruct((1, 128), jnp.float32),
        in_specs=[vmem] * 5,
        out_specs=vmem,
    )(rel_logits, rel_tgt, rel_wv, ent_logits, ent_tgt)


# ----------------------------------------------------------------------------
# Host-side rectangular assignment: Jonker-Volgenant shortest augmenting path,
# O(n^3).  Replaces scipy.optimize.linear_sum_assignment (tiny, no-grad).
# ----------------------------------------------------------------------------
def _linear_sum_assignment(cost):
    cost = np.asarray(cost, dtype=np.float64)
    nr, nc = cost.shape
    if nr == 0 or nc == 0:
        return np.zeros(0, np.int64), np.zeros(0, np.int64)
    transpose = nc < nr
    c = cost.T if transpose else cost          # shape (n, m), n <= m
    n, m = c.shape
    u = np.zeros(n + 1)
    v = np.zeros(m + 1)
    p = np.zeros(m + 1, dtype=np.int64)        # p[j] = row matched to col j (1-based)
    way = np.zeros(m + 1, dtype=np.int64)
    for i in range(1, n + 1):
        p[0] = i
        j0 = 0
        minv = np.full(m + 1, np.inf)
        used = np.zeros(m + 1, dtype=bool)
        while True:
            used[j0] = True
            i0 = p[j0]
            delta = np.inf
            j1 = 0
            for j in range(1, m + 1):
                if not used[j]:
                    cur = c[i0 - 1, j - 1] - u[i0] - v[j]
                    if cur < minv[j]:
                        minv[j] = cur
                        way[j] = j0
                    if minv[j] < delta:
                        delta = minv[j]
                        j1 = j
            for j in range(m + 1):
                if used[j]:
                    u[p[j]] += delta
                    v[j] -= delta
                else:
                    minv[j] -= delta
            j0 = j1
            if p[j0] == 0:
                break
        while True:
            j1 = way[j0]
            p[j0] = p[j1]
            j0 = j1
            if j0 == 0:
                break
    rows, cols = [], []
    for j in range(1, m + 1):
        if p[j] != 0:
            rows.append(p[j] - 1)
            cols.append(j - 1)
    rows = np.asarray(rows, np.int64)
    cols = np.asarray(cols, np.int64)
    if transpose:
        rows, cols = cols, rows
    order = np.argsort(rows)
    return rows[order], cols[order]


# ----------------------------------------------------------------------------
# SetCriterion (forward only), Pallas-backed.
# ----------------------------------------------------------------------------
class SetCriterionPallas:
    def __init__(self, num_classes, loss_weight, na_coef, losses, matcher='avg'):
        self.num_classes = num_classes
        self.loss_weight = loss_weight
        self.losses = losses
        self.matcher = matcher
        rel_weight = np.ones(num_classes + 1, np.float32)
        rel_weight[-1] = na_coef
        self.rel_weight = jnp.asarray(rel_weight.reshape(1, -1))   # [1, C1] VMEM vector

    # ---------------- matcher (HungarianMatcher.forward) ----------------
    def match(self, outputs, targets):
        if self.matcher != 'avg':
            # TODO(synk): 'min' matcher branch not implemented (only 'avg').
            raise ValueError('Wrong matcher')
        rel = outputs['pred_rel_logits']
        bsz, num_gen, c1 = rel.shape
        seq = outputs['head_start_logits'].shape[-1]
        n = bsz * num_gen

        keys = ('relation', 'head_start_index', 'head_end_index',
                'tail_start_index', 'tail_end_index')
        gold = {k: np.concatenate([np.asarray(v[k], np.int64) for v in targets])
                for k in keys}
        t_total = gold['relation'].shape[0]
        t_pad = max(128, _round_up(max(t_total, 1), 128))   # lane-dense gold axis

        c1p = _round_up(c1, 128)
        sp = _round_up(seq, 128)
        # Row tile: biggest that stays comfortably inside scoped VMEM on all of
        # v5e/v6e/v7x (v7x has only 64 MiB physical VMEM).
        tile_n = min(256, _round_up(n, 8))
        n_pad = _round_up(n, tile_n)

        def pad_logits(x, cols_pad):
            x2 = x.reshape(n, -1)
            return jnp.pad(x2, ((0, n_pad - n), (0, cols_pad - x2.shape[1])),
                           constant_values=_NEG)

        # Stacked one-hot gather matrix (bf16), one row block per head.
        oh = np.zeros((c1p + 4 * sp, t_pad), np.float32)
        cols = np.arange(t_total)
        offs = (0, c1p, c1p + sp, c1p + 2 * sp, c1p + 3 * sp)
        for off, k in zip(offs, keys):
            oh[off + gold[k], cols] = 1.0
        oh = jnp.asarray(oh, dtype=jnp.bfloat16)

        cost = compute_cost_matrix(
            pad_logits(rel, c1p),
            pad_logits(outputs['head_start_logits'], sp),
            pad_logits(outputs['head_end_logits'], sp),
            pad_logits(outputs['tail_start_logits'], sp),
            pad_logits(outputs['tail_end_logits'], sp),
            oh,
            self.loss_weight['relation'],
            self.loss_weight['head_entity'],
            self.loss_weight['tail_entity'],
            tile_n)

        # Host sync is unavoidable here: the Hungarian solver runs on host.
        cost = np.asarray(jax.device_get(cost))[:n, :t_total]
        cost = cost.reshape(bsz, num_gen, t_total)

        indices = []
        off = 0
        for b in range(bsz):
            ng = len(targets[b]['relation'])
            indices.append(_linear_sum_assignment(cost[b, :, off:off + ng]))
            off += ng
        return indices

    @staticmethod
    def _get_src_permutation_idx(indices):
        batch_idx = np.concatenate(
            [np.full_like(np.asarray(src, np.int64), i) for i, (src, _) in enumerate(indices)])
        src_idx = np.concatenate([np.asarray(src, np.int64) for src, _ in indices])
        return batch_idx, src_idx

    # ---------------- fused relation + entity losses ----------------
    def _compute_fused_losses(self, outputs, targets, indices):
        rel_logits = outputs['pred_rel_logits']
        bsz, num_gen, c1 = rel_logits.shape
        seq = outputs['head_start_logits'].shape[-1]
        n = bsz * num_gen

        batch_idx, src_idx = self._get_src_permutation_idx(indices)
        m = len(src_idx)
        m_pad = _round_up(max(m, 1), 8)

        # Relation targets: NA class everywhere, matched rows get their gold class.
        target_classes = np.full((bsz, num_gen), self.num_classes, np.int64)
        if m:
            target_rel = np.concatenate(
                [np.asarray(t['relation'], np.int64)[j]
                 for t, (_, j) in zip(targets, indices)])
            target_classes[batch_idx, src_idx] = target_rel
        rel_tgt = jnp.asarray(target_classes.reshape(n, 1).astype(np.int32))

        # Entity: gather the matched rows on device and stack the 4 heads row-wise.
        # TODO(synk): this row gather could move inside the Pallas kernel via
        # PrefetchScalarGridSpec + pl.Element index_map once M grows large.
        flat_idx = np.zeros((m_pad,), np.int32)
        if m:
            flat_idx[:m] = (batch_idx * num_gen + src_idx).astype(np.int32)
        flat_idx = jnp.asarray(flat_idx)

        def gather(name):
            return jnp.take(outputs[name].reshape(n, seq), flat_idx, axis=0)

        ent_logits = jnp.concatenate(
            [gather('head_start_logits'), gather('head_end_logits'),
             gather('tail_start_logits'), gather('tail_end_logits')], axis=0)

        def tgt(name):
            arr = np.full((m_pad,), -1, np.int32)   # -1 => masked/padded row
            if m:
                arr[:m] = np.concatenate(
                    [np.asarray(t[name], np.int64)[j]
                     for t, (_, j) in zip(targets, indices)]).astype(np.int32)
            return arr

        ent_tgt = jnp.asarray(np.concatenate(
            [tgt('head_start_index'), tgt('head_end_index'),
             tgt('tail_start_index'), tgt('tail_end_index')]).reshape(4 * m_pad, 1))

        return fused_set_losses(rel_logits.reshape(n, c1), rel_tgt,
                                self.rel_weight, ent_logits, ent_tgt, m_pad)

    @staticmethod
    def empty_targets(targets):
        return all(len(t['relation']) == 0 for t in targets)

    def __call__(self, outputs, targets):
        indices = self.match(outputs, targets)
        vals = self._compute_fused_losses(outputs, targets, indices)   # (1, 128)
        losses = {}
        for loss in self.losses:
            if loss == 'relation':
                losses['relation'] = vals[0, 0]
            elif loss == 'entity':
                if not self.empty_targets(targets):
                    losses['head_entity'] = 0.5 * (vals[0, 1] + vals[0, 2])
                    losses['tail_entity'] = 0.5 * (vals[0, 3] + vals[0, 4])
            # TODO(synk): 'cardinality' (logging-only, no grad, not in loss_weight)
            # is omitted from the weighted sum, like in the reference.
        total = sum(losses[k] * self.loss_weight[k]
                    for k in losses if k in self.loss_weight)
        return total


# ----------------------------------------------------------------------------
if __name__ == "__main__":
    B, Q, S = 2, 8, 32          # batch, generated triples, seq_len
    NUM_CLASSES = 7             # relation classes (+1 NA class => 8 logits)

    key = jax.random.PRNGKey(0)
    k0, k1, k2, k3, k4 = jax.random.split(key, 5)
    outputs = {
        'pred_rel_logits': jax.random.normal(k0, (B, Q, NUM_CLASSES + 1), jnp.float32),
        'head_start_logits': jax.random.normal(k1, (B, Q, S), jnp.float32),
        'head_end_logits': jax.random.normal(k2, (B, Q, S), jnp.float32),
        'tail_start_logits': jax.random.normal(k3, (B, Q, S), jnp.float32),
        'tail_end_logits': jax.random.normal(k4, (B, Q, S), jnp.float32),
    }
    targets = [
        {'relation': np.array([1, 3], np.int64),
         'head_start_index': np.array([2, 5], np.int64),
         'head_end_index': np.array([3, 7], np.int64),
         'tail_start_index': np.array([10, 1], np.int64),
         'tail_end_index': np.array([12, 4], np.int64)},
        {'relation': np.array([0, 2, 6], np.int64),
         'head_start_index': np.array([4, 8, 0], np.int64),
         'head_end_index': np.array([6, 9, 1], np.int64),
         'tail_start_index': np.array([14, 20, 25], np.int64),
         'tail_end_index': np.array([15, 22, 30], np.int64)},
    ]

    loss_weight = {'relation': 1.0, 'head_entity': 2.0, 'tail_entity': 2.0}
    criterion = SetCriterionPallas(
        num_classes=NUM_CLASSES, loss_weight=loss_weight, na_coef=0.25,
        losses=['entity', 'relation'], matcher='avg')

    loss = criterion(outputs, targets)
    loss = jax.block_until_ready(loss)
    assert np.isfinite(float(loss))
    print("KERNEL_OK")
</pallas_src>

<mosaic_0001>
module attributes {stable_mosaic.version = 11 : i64} {
  func.func @_cost_kernel(%arg0: i32, %arg1: memref<16x128xf32, #tpu.memory_space<vmem>>, %arg2: memref<16x128xf32, #tpu.memory_space<vmem>>, %arg3: memref<16x128xf32, #tpu.memory_space<vmem>>, %arg4: memref<16x128xf32, #tpu.memory_space<vmem>>, %arg5: memref<16x128xf32, #tpu.memory_space<vmem>>, %arg6: memref<640x128xbf16, #tpu.memory_space<vmem>>, %arg7: memref<16x128xf32, #tpu.memory_space<vmem>>) attributes {dimension_semantics = [#tpu.dimension_semantics<parallel>], iteration_bounds = array<i64: 1>, scalar_prefetch = 0 : i64, scratch_operands = 0 : i64, tpu.core_type = #tpu.core_type<tc>, window_params = [{transform_indices = @transform_0, window_bounds = array<i64: 16, 128>}, {transform_indices = @transform_1, window_bounds = array<i64: 16, 128>}, {transform_indices = @transform_2, window_bounds = array<i64: 16, 128>}, {transform_indices = @transform_3, window_bounds = array<i64: 16, 128>}, {transform_indices = @transform_4, window_bounds = array<i64: 16, 128>}, {pipeline_mode = #tpu.pipeline_mode<synchronous>, transform_indices = @transform_5, window_bounds = array<i64: 640, 128>}, {transform_indices = @transform_6, window_bounds = array<i64: 16, 128>}]} {
    %c0 = arith.constant 0 : index
    %c0_0 = arith.constant 0 : index
    %0 = vector.load %arg1[%c0, %c0_0] : memref<16x128xf32, #tpu.memory_space<vmem>>, vector<16x128xf32>
    %cst = arith.constant dense<0xFF800000> : vector<16xf32>
    %1 = vector.multi_reduction <maximumf>, %0, %cst [1] : vector<16x128xf32> to vector<16xf32>
    %2 = vector.shape_cast %1 : vector<16xf32> to vector<16x1xf32>
    %3 = vector.broadcast %2 : vector<16x1xf32> to vector<16x128xf32>
    %4 = arith.subf %0, %3 : vector<16x128xf32>
    %5 = math.exp %4 : vector<16x128xf32>
    %cst_1 = arith.constant dense<0.000000e+00> : vector<16xf32>
    %6 = vector.multi_reduction <add>, %5, %cst_1 [1] : vector<16x128xf32> to vector<16xf32>
    %7 = vector.shape_cast %6 : vector<16xf32> to vector<16x1xf32>
    %8 = vector.broadcast %7 : vector<16x1xf32> to vector<16x128xf32>
    %9 = arith.divf %5, %8 : vector<16x128xf32>
    %cst_2 = arith.constant 1.000000e+00 : f32
    %10 = vector.broadcast %cst_2 : f32 to vector<16x128xf32>
    %11 = arith.mulf %10, %9 : vector<16x128xf32>
    %c0_3 = arith.constant 0 : index
    %c0_4 = arith.constant 0 : index
    %12 = vector.load %arg2[%c0_3, %c0_4] : memref<16x128xf32, #tpu.memory_space<vmem>>, vector<16x128xf32>
    %cst_5 = arith.constant dense<0xFF800000> : vector<16xf32>
    %13 = vector.multi_reduction <maximumf>, %12, %cst_5 [1] : vector<16x128xf32> to vector<16xf32>
    %14 = vector.shape_cast %13 : vector<16xf32> to vector<16x1xf32>
    %15 = vector.broadcast %14 : vector<16x1xf32> to vector<16x128xf32>
    %16 = arith.subf %12, %15 : vector<16x128xf32>
    %17 = math.exp %16 : vector<16x128xf32>
    %cst_6 = arith.constant dense<0.000000e+00> : vector<16xf32>
    %18 = vector.multi_reduction <add>, %17, %cst_6 [1] : vector<16x128xf32> to vector<16xf32>
    %19 = vector.shape_cast %18 : vector<16xf32> to vector<16x1xf32>
    %20 = vector.broadcast %19 : vector<16x1xf32> to vector<16x128xf32>
    %21 = arith.divf %17, %20 : vector<16x128xf32>
    %cst_7 = arith.constant 1.000000e+00 : f32
    %22 = vector.broadcast %cst_7 : f32 to vector<16x128xf32>
    %23 = arith.mulf %22, %21 : vector<16x128xf32>
    %c0_8 = arith.constant 0 : index
    %c0_9 = arith.constant 0 : index
    %24 = vector.load %arg3[%c0_8, %c0_9] : memref<16x128xf32, #tpu.memory_space<vmem>>, vector<16x128xf32>
    %cst_10 = arith.constant dense<0xFF800000> : vector<16xf32>
    %25 = vector.multi_reduction <maximumf>, %24, %cst_10 [1] : vector<16x128xf32> to vector<16xf32>
    %26 = vector.shape_cast %25 : vector<16xf32> to vector<16x1xf32>
    %27 = vector.broadcast %26 : vector<16x1xf32> to vector<16x128xf32>
    %28 = arith.subf %24, %27 : vector<16x128xf32>
    %29 = math.exp %28 : vector<16x128xf32>
    %cst_11 = arith.constant dense<0.000000e+00> : vector<16xf32>
    %30 = vector.multi_reduction <add>, %29, %cst_11 [1] : vector<16x128xf32> to vector<16xf32>
    %31 = vector.shape_cast %30 : vector<16xf32> to vector<16x1xf32>
    %32 = vector.broadcast %31 : vector<16x1xf32> to vector<16x128xf32>
    %33 = arith.divf %29, %32 : vector<16x128xf32>
    %cst_12 = arith.constant 1.000000e+00 : f32
    %34 = vector.broadcast %cst_12 : f32 to vector<16x128xf32>
    %35 = arith.mulf %34, %33 : vector<16x128xf32>
    %c0_13 = arith.constant 0 : index
    %c0_14 = arith.constant 0 : index
    %36 = vector.load %arg4[%c0_13, %c0_14] : memref<16x128xf32, #tpu.memory_space<vmem>>, vector<16x128xf32>
    %cst_15 = arith.constant dense<0xFF800000> : vector<16xf32>
    %37 = vector.multi_reduction <maximumf>, %36, %cst_15 [1] : vector<16x128xf32> to vector<16xf32>
    %38 = vector.shape_cast %37 : vector<16xf32> to vector<16x1xf32>
    %39 = vector.broadcast %38 : vector<16x1xf32> to vector<16x128xf32>
    %40 = arith.subf %36, %39 : vector<16x128xf32>
    %41 = math.exp %40 : vector<16x128xf32>
    %cst_16 = arith.constant dense<0.000000e+00> : vector<16xf32>
    %42 = vector.multi_reduction <add>, %41, %cst_16 [1] : vector<16x128xf32> to vector<16xf32>
    %43 = vector.shape_cast %42 : vector<16xf32> to vector<16x1xf32>
    %44 = vector.broadcast %43 : vector<16x1xf32> to vector<16x128xf32>
    %45 = arith.divf %41, %44 : vector<16x128xf32>
    %cst_17 = arith.constant 1.000000e+00 : f32
    %46 = vector.broadcast %cst_17 : f32 to vector<16x128xf32>
    %47 = arith.mulf %46, %45 : vector<16x128xf32>
    %c0_18 = arith.constant 0 : index
    %c0_19 = arith.constant 0 : index
    %48 = vector.load %arg5[%c0_18, %c0_19] : memref<16x128xf32, #tpu.memory_space<vmem>>, vector<16x128xf32>
    %cst_20 = arith.constant dense<0xFF800000> : vector<16xf32>
    %49 = vector.multi_reduction <maximumf>, %48, %cst_20 [1] : vector<16x128xf32> to vector<16xf32>
    %50 = vector.shape_cast %49 : vector<16xf32> to vector<16x1xf32>
    %51 = vector.broadcast %50 : vector<16x1xf32> to vector<16x128xf32>
    %52 = arith.subf %48, %51 : vector<16x128xf32>
    %53 = math.exp %52 : vector<16x128xf32>
    %cst_21 = arith.constant dense<0.000000e+00> : vector<16xf32>
    %54 = vector.multi_reduction <add>, %53, %cst_21 [1] : vector<16x128xf32> to vector<16xf32>
    %55 = vector.shape_cast %54 : vector<16xf32> to vector<16x1xf32>
    %56 = vector.broadcast %55 : vector<16x1xf32> to vector<16x128xf32>
    %57 = arith.divf %53, %56 : vector<16x128xf32>
    %cst_22 = arith.constant 1.000000e+00 : f32
    %58 = vector.broadcast %cst_22 : f32 to vector<16x128xf32>
    %59 = arith.mulf %58, %57 : vector<16x128xf32>
    %60 = tpu.concatenate %11, %23, %35, %47, %59 in 1 : vector<16x128xf32>, vector<16x128xf32>, vector<16x128xf32>, vector<16x128xf32>, vector<16x128xf32> -> vector<16x640xf32>
    %61 = arith.truncf %60 : vector<16x640xf32> to vector<16x640xbf16>
    %c0_23 = arith.constant 0 : index
    %c0_24 = arith.constant 0 : index
    %62 = vector.load %arg6[%c0_23, %c0_24] : memref<640x128xbf16, #tpu.memory_space<vmem>>, vector<640x128xbf16>
    %cst_25 = arith.constant dense<0.000000e+00> : vector<16x128xf32>
    %63 = tpu.matmul %61, %62, %cst_25 {dimension_numbers = #tpu.dot_dimension_numbers<[1], [0], [0], [1], [0, 0, 1, 1], [], []>} : vector<16x640xbf16>, vector<640x128xbf16>, vector<16x128xf32> -> vector<16x128xf32>
    %cst_26 = arith.constant 0.000000e+00 : f32
    %64 = vector.broadcast %cst_26 : f32 to vector<16x128xf32>
    %65 = arith.subf %64, %63 : vector<16x128xf32>
    %c0_27 = arith.constant 0 : index
    %c0_28 = arith.constant 0 : index
    %66 = vector.load %arg7[%c0_27, %c0_28] : memref<16x128xf32, #tpu.memory_space<vmem>>, vector<16x128xf32>
    tpu.vector_store %arg7[%c0_27, %c0_28], %65 {strides = array<i32>} : memref<16x128xf32, #tpu.memory_space<vmem>>, vector<16x128xf32>,
    return
  }
  func.func @transform_0(%arg0: i32) -> (i32, i32) {
    %c0_i32 = arith.constant 0 : i32
    %c0_i32_0 = arith.constant 0 : i32
    return %arg0, %c0_i32 : i32, i32
  }
  func.func @transform_1(%arg0: i32) -> (i32, i32) {
    %c0_i32 = arith.constant 0 : i32
    %c0_i32_0 = arith.constant 0 : i32
    return %arg0, %c0_i32 : i32, i32
  }
  func.func @transform_2(%arg0: i32) -> (i32, i32) {
    %c0_i32 = arith.constant 0 : i32
    %c0_i32_0 = arith.constant 0 : i32
    return %arg0, %c0_i32 : i32, i32
  }
  func.func @transform_3(%arg0: i32) -> (i32, i32) {
    %c0_i32 = arith.constant 0 : i32
    %c0_i32_0 = arith.constant 0 : i32
    return %arg0, %c0_i32 : i32, i32
  }
  func.func @transform_4(%arg0: i32) -> (i32, i32) {
    %c0_i32 = arith.constant 0 : i32
    %c0_i32_0 = arith.constant 0 : i32
    return %arg0, %c0_i32 : i32, i32
  }
  func.func @transform_5(%arg0: i32) -> (i32, i32) {
    %c0_i32 = arith.constant 0 : i32
    %c0_i32_0 = arith.constant 0 : i32
    %c0_i32_1 = arith.constant 0 : i32
    return %c0_i32, %c0_i32_0 : i32, i32
  }
  func.func @transform_6(%arg0: i32) -> (i32, i32) {
    %c0_i32 = arith.constant 0 : i32
    %c0_i32_0 = arith.constant 0 : i32
    return %arg0, %c0_i32 : i32, i32
  }
}

</mosaic_0001>

<llo_original>
// kernel: tpu_custom_call.1
$region0: #{tpu_custom_call.1}
  #allocation0 [shape = 'u32[]', space=smem, size = 0x4, offset = 0x4, fixed_abs, tag = 'smem constant byte address 0x4 - core index']
  #allocation1 [shape = 'u32[72,128]{1,0:T(1,128)}', space=vmem, size = 0x9000, scoped, tag = 'internal scratch']
  %s0 = inlined_call_operand.hbm [shape: f32[16,128], index: 0, kind: input, shape index: {}]
  %s1 = inlined_call_operand.hbm [shape: f32[16,128], index: 1, kind: input, shape index: {}]
  %s2 = inlined_call_operand.hbm [shape: f32[16,128], index: 2, kind: input, shape index: {}]
  %s3 = inlined_call_operand.hbm [shape: f32[16,128], index: 3, kind: input, shape index: {}]
  %s4 = inlined_call_operand.hbm [shape: f32[16,128], index: 4, kind: input, shape index: {}]
  %s5 = inlined_call_operand.hbm [shape: bf16[640,128], index: 5, kind: input, shape index: {}]
  %s6 = inlined_call_operand.hbm [shape: f32[16,128], index: 6, kind: output, shape index: {}]
  %s7 = sld [smem:[#allocation0]]
  $region58: #{tpu_custom_call.1} parent=0
    _
  %s9 = ssub.s32 1, %s7
  %s10 = scalar_select 0, %s9, %s7
  $region1: #{tpu_custom_call.1} parent=0
    #allocation2 [shape = 'u8[8192]{0}', space=vmem, size = 0x2000, scoped, tag = 'input window, operand 0, single buffered']
    #allocation3 [shape = 's32[1]{0}', space=sflag, size = 0x4, scoped, tag = 'scoped memory for tpu_custom_call.1']
    #allocation4 [shape = 's32[1]{0}', space=sflag, size = 0x4, scoped, tag = 'scoped memory for tpu_custom_call.1']
    #allocation5 [shape = 'u8[8192]{0}', space=vmem, size = 0x2000, scoped, tag = 'input window, operand 1, single buffered']
    #allocation6 [shape = 's32[1]{0}', space=sflag, size = 0x4, scoped, tag = 'scoped memory for tpu_custom_call.1']
    #allocation7 [shape = 'u8[8192]{0}', space=vmem, size = 0x2000, scoped, tag = 'input window, operand 2, single buffered']
    #allocation8 [shape = 'u8[8192]{0}', space=vmem, size = 0x2000, scoped, tag = 'input window, operand 3, single buffered']
    #allocation9 [shape = 's32[1]{0}', space=sflag, size = 0x4, scoped, tag = 'scoped memory for tpu_custom_call.1']
    #allocation10 [shape = 'u8[8192]{0}', space=vmem, size = 0x2000, scoped, tag = 'input window, operand 4, single buffered']
    #allocation11 [shape = 'u8[163840]{0}', space=vmem, size = 0x28000, scoped, tag = 'input window, operand 5, single buffered']
    #allocation12 [shape = 's32[1]{0}', space=sflag, size = 0x4, scoped, tag = 'scoped memory for tpu_custom_call.1']
    #allocation13 [shape = 'u8[8192]{0}', space=vmem, size = 0x2000, scoped, tag = 'output window, operand 0, single buffered']
    %11 = vsyncpa [#allocation3], 0
    %12 = vsyncpa [#allocation6], 0
    %13 = vsyncpa [#allocation9], 0
    %14 = vsyncpa [#allocation12], 0
    %15 = vsyncpa [#allocation4], 0
    // Predicated region
    $region2: #{tpu_custom_call.1} parent=1 // pred_check
      _
    $region3: #{tpu_custom_call.1} parent=1 // pred_check_branch
      %17 = sbr.rel (0) target = $region5
    $region4: #{tpu_custom_call.1} parent=1 // pred_region
      %19 = vsyncadd [#allocation3], 0
      %s20 = sshll.u32 %s0, 4
      %s21 = int_to_ptr.hbm [resolvable:$true] %s20
      %s22 = sshll.u32 [#allocation2], 4
      %s23 = int_to_ptr.vmem [resolvable:$true] %s22
      %28 = dma.hbm_to_vmem [thread:$0]  %s21, 256, %s23, [#allocation3], 128, 128, 8
    $region5: #{tpu_custom_call.1} parent=1 // pred_fallthru
      _
    // Predicated region
    $region6: #{tpu_custom_call.1} parent=1 // pred_check
      _
    $region7: #{tpu_custom_call.1} parent=1 // pred_check_branch
      %30 = sbr.rel (0) target = $region9
    $region8: #{tpu_custom_call.1} parent=1 // pred_region
      %32 = vsyncadd [#allocation6], 0
      %s33 = sshll.u32 %s1, 4
      %s34 = int_to_ptr.hbm [resolvable:$true] %s33
      %s35 = sshll.u32 [#allocation5], 4
      %s36 = int_to_ptr.vmem [resolvable:$true] %s35
      %41 = dma.hbm_to_vmem [thread:$0]  %s34, 256, %s36, [#allocation6], 128, 128, 8
    $region9: #{tpu_custom_call.1} parent=1 // pred_fallthru
      _
    // Predicated region
    $region10: #{tpu_custom_call.1} parent=1 // pred_check
      _
    $region11: #{tpu_custom_call.1} parent=1 // pred_check_branch
      %43 = sbr.rel (0) target = $region13
    $region12: #{tpu_custom_call.1} parent=1 // pred_region
      %45 = vsyncadd [#allocation6], 0
      %s46 = sshll.u32 %s2, 4
      %s47 = int_to_ptr.hbm [resolvable:$true] %s46
      %s48 = sshll.u32 [#allocation7], 4
      %s49 = int_to_ptr.vmem [resolvable:$true] %s48
      %54 = dma.hbm_to_vmem [thread:$0]  %s47, 256, %s49, [#allocation6], 128, 128, 8
    $region13: #{tpu_custom_call.1} parent=1 // pred_fallthru
      _
    // Predicated region
    $region14: #{tpu_custom_call.1} parent=1 // pred_check
      _
    $region15: #{tpu_custom_call.1} parent=1 // pred_check_branch
      %56 = sbr.rel (0) target = $region17
    $region16: #{tpu_custom_call.1} parent=1 // pred_region
      %58 = vsyncadd [#allocation9], 0
      %s59 = sshll.u32 %s3, 4
      %s60 = int_to_ptr.hbm [resolvable:$true] %s59
      %s61 = sshll.u32 [#allocation8], 4
      %s62 = int_to_ptr.vmem [resolvable:$true] %s61
      %67 = dma.hbm_to_vmem [thread:$0]  %s60, 256, %s62, [#allocation9], 128, 128, 8
    $region17: #{tpu_custom_call.1} parent=1 // pred_fallthru
      _
    // Predicated region
    $region18: #{tpu_custom_call.1} parent=1 // pred_check
      _
    $region19: #{tpu_custom_call.1} parent=1 // pred_check_branch
      %69 = sbr.rel (0) target = $region21
    $region20: #{tpu_custom_call.1} parent=1 // pred_region
      %71 = vsyncadd [#allocation9], 0
      %s72 = sshll.u32 %s4, 4
      %s73 = int_to_ptr.hbm [resolvable:$true] %s72
      %s74 = sshll.u32 [#allocation10], 4
      %s75 = int_to_ptr.vmem [resolvable:$true] %s74
      %80 = dma.hbm_to_vmem [thread:$0]  %s73, 256, %s75, [#allocation9], 128, 128, 8
    $region21: #{tpu_custom_call.1} parent=1 // pred_fallthru
      _
    // Predicated region
    $region22: #{tpu_custom_call.1} parent=1 // pred_check
      _
    $region23: #{tpu_custom_call.1} parent=1 // pred_check_branch
      %82 = sbr.rel (0) target = $region25
    $region24: #{tpu_custom_call.1} parent=1 // pred_region
      %84 = vsyncadd [#allocation12], 0
      %s85 = sshll.u32 %s5, 4
      %s86 = int_to_ptr.hbm [resolvable:$true] %s85
      %s87 = sshll.u32 [#allocation11], 4
      %s88 = int_to_ptr.vmem [resolvable:$true] %s87
      %93 = dma.hbm_to_vmem [thread:$0]  %s86, 5120, %s88, [#allocation12], 64, 64, 4
    $region25: #{tpu_custom_call.1} parent=1 // pred_fallthru
      _
    // Predicated region
    $region26: #{tpu_custom_call.1} parent=1 // pred_check
      _
    $region27: #{tpu_custom_call.1} parent=1 // pred_check_branch
      %95 = sbr.rel (0) target = $region29
    $region28: #{tpu_custom_call.1} parent=1 // pred_region
      %97 = dma.done [#allocation3], 256
    $region29: #{tpu_custom_call.1} parent=1 // pred_fallthru
      _
    // Predicated region
    $region30: #{tpu_custom_call.1} parent=1 // pred_check
      _
    $region31: #{tpu_custom_call.1} parent=1 // pred_check_branch
      %99 = sbr.rel (0) target = $region33
    $region32: #{tpu_custom_call.1} parent=1 // pred_region
      %101 = dma.done [#allocation6], 256
    $region33: #{tpu_custom_call.1} parent=1 // pred_fallthru
      _
    // Predicated region
    $region34: #{tpu_custom_call.1} parent=1 // pred_check
      _
    $region35: #{tpu_custom_call.1} parent=1 // pred_check_branch
      %103 = sbr.rel (0) target = $region37
    $region36: #{tpu_custom_call.1} parent=1 // pred_region
      %105 = dma.done [#allocation6], 256
    $region37: #{tpu_custom_call.1} parent=1 // pred_fallthru
      _
    // Predicated region
    $region38: #{tpu_custom_call.1} parent=1 // pred_check
      _
    $region39: #{tpu_custom_call.1} parent=1 // pred_check_branch
      %107 = sbr.rel (0) target = $region41
    $region40: #{tpu_custom_call.1} parent=1 // pred_region
      %109 = dma.done [#allocation9], 256
    $region41: #{tpu_custom_call.1} parent=1 // pred_fallthru
      _
    // Predicated region
    $region42: #{tpu_custom_call.1} parent=1 // pred_check
      _
    $region43: #{tpu_custom_call.1} parent=1 // pred_check_branch
      %111 = sbr.rel (0) target = $region45
    $region44: #{tpu_custom_call.1} parent=1 // pred_region
      %113 = dma.done [#allocation9], 256
    $region45: #{tpu_custom_call.1} parent=1 // pred_fallthru
      _
    // Predicated region
    $region46: #{tpu_custom_call.1} parent=1 // pred_check
      _
    $region47: #{tpu_custom_call.1} parent=1 // pred_check_branch
      %115 = sbr.rel (0) target = $region49
    $region48: #{tpu_custom_call.1} parent=1 // pred_region
      %117 = dma.done [#allocation12], 5120
    $region49: #{tpu_custom_call.1} parent=1 // pred_fallthru
      _
    %v118 = vld [vmem:[#allocation2] sm:$0xff]
    %v119 = vld [vmem:[#allocation2 + $0x8] sm:$0xff]
    %120 = vmax.xlane.f32.xlu0 %v118
    %v121 = vpop.xlane.xlu0 %120
    %122 = vmax.xlane.f32.xlu0 %v119
    %v123 = vpop.xlane.xlu0 %122
    %v124 = vsub.f32 %v118, %v121
    %v125 = vsub.f32 %v119, %v123
    %v126 = vmul.f32 %v124, 1.442695
    %v127 = vpow.pop %v126
    %v128 = vmul.f32 %v125, 1.442695
    %v129 = vpow.pop %v128
    %130 = vadd.xlane.f32.xlu0 %v127
    %v131 = vpop.xlane.xlu0 %130
    %132 = vadd.xlane.f32.xlu0 %v129
    %v133 = vpop.xlane.xlu0 %132
    %v134 = vrcp.pop %v131
    %v135 = vmul.f32 %v131, %v134
    %v136 = vsub.f32 1.0, %v135
    %v137 = vmul.f32 %v134, %v136
    %v138 = vadd.f32 %v134, %v137
    %vm139 = vweird.f32 %v131
    %vm140 = vweird.f32 %v134
    %vm141 = vmor %vm139, %vm140
    %v142 = vsel %vm141, %v134, %v138
    %v143 = vand.u32 2147483647, %v131
    %vm144 = vcmp.eq.f32.partialorder %v143, 8.507059e+37
    %v145 = vand.u32 %v131, 2147483648
    %v146 = vor.u32 1.1754944e-38, %v145
    %v147 = vsel %vm144, %v146, %v142
    %v148 = vmul.f32 %v127, %v147
    %v149 = vrcp.pop %v133
    %v150 = vmul.f32 %v133, %v149
    %v151 = vsub.f32 1.0, %v150
    %v152 = vmul.f32 %v149, %v151
    %v153 = vadd.f32 %v149, %v152
    %vm154 = vweird.f32 %v133
    %vm155 = vweird.f32 %v149
    %vm156 = vmor %vm154, %vm155
    %v157 = vsel %vm156, %v149, %v153
    %v158 = vand.u32 2147483647, %v133
    %vm159 = vcmp.eq.f32.partialorder %v158, 8.507059e+37
    %v160 = vand.u32 %v133, 2147483648
    %v161 = vor.u32 1.1754944e-38, %v160
    %v162 = vsel %vm159, %v161, %v157
    %v163 = vmul.f32 %v129, %v162
    %v164 = vld [vmem:[#allocation5] sm:$0xff]
    %v165 = vld [vmem:[#allocation5 + $0x8] sm:$0xff]
    %166 = vmax.xlane.f32.xlu0 %v164
    %v167 = vpop.xlane.xlu0 %166
    %168 = vmax.xlane.f32.xlu0 %v165
    %v169 = vpop.xlane.xlu0 %168
    %v170 = vsub.f32 %v164, %v167
    %v171 = vsub.f32 %v165, %v169
    %v172 = vmul.f32 %v170, 1.442695
    %v173 = vpow.pop %v172
    %v174 = vmul.f32 %v171, 1.442695
    %v175 = vpow.pop %v174
    %176 = vadd.xlane.f32.xlu0 %v173
    %v177 = vpop.xlane.xlu0 %176
    %178 = vadd.xlane.f32.xlu0 %v175
    %v179 = vpop.xlane.xlu0 %178
    %v180 = vrcp.pop %v177
    %v181 = vmul.f32 %v177, %v180
    %v182 = vsub.f32 1.0, %v181
    %v183 = vmul.f32 %v180, %v182
    %v184 = vadd.f32 %v180, %v183
    %vm185 = vweird.f32 %v177
    %vm186 = vweird.f32 %v180
    %vm187 = vmor %vm185, %vm186
    %v188 = vsel %vm187, %v180, %v184
    %v189 = vand.u32 2147483647, %v177
    %vm190 = vcmp.eq.f32.partialorder %v189, 8.507059e+37
    %v191 = vand.u32 %v177, 2147483648
    %v192 = vor.u32 1.1754944e-38, %v191
    %v193 = vsel %vm190, %v192, %v188
    %v194 = vmul.f32 %v173, %v193
    %v195 = vrcp.pop %v179
    %v196 = vmul.f32 %v179, %v195
    %v197 = vsub.f32 1.0, %v196
    %v198 = vmul.f32 %v195, %v197
    %v199 = vadd.f32 %v195, %v198
    %vm200 = vweird.f32 %v179
    %vm201 = vweird.f32 %v195
    %vm202 = vmor %vm200, %vm201
    %v203 = vsel %vm202, %v195, %v199
    %v204 = vand.u32 2147483647, %v179
    %vm205 = vcmp.eq.f32.partialorder %v204, 8.507059e+37
    %v206 = vand.u32 %v179, 2147483648
    %v207 = vor.u32 1.1754944e-38, %v206
    %v208 = vsel %vm205, %v207, %v203
    %v209 = vmul.f32 %v175, %v208
    %v210 = vld [vmem:[#allocation7] sm:$0xff]
    %v211 = vld [vmem:[#allocation7 + $0x8] sm:$0xff]
    %212 = vmax.xlane.f32.xlu0 %v210
    %v213 = vpop.xlane.xlu0 %212
    %214 = vmax.xlane.f32.xlu0 %v211
    %v215 = vpop.xlane.xlu0 %214
    %v216 = vsub.f32 %v210, %v213
    %v217 = vsub.f32 %v211, %v215
    %v218 = vmul.f32 %v216, 1.442695
    %v219 = vpow.pop %v218
    %v220 = vmul.f32 %v217, 1.442695
    %v221 = vpow.pop %v220
    %222 = vadd.xlane.f32.xlu0 %v219
    %v223 = vpop.xlane.xlu0 %222
    %224 = vadd.xlane.f32.xlu0 %v221
    %v225 = vpop.xlane.xlu0 %224
    %v226 = vrcp.pop %v223
    %v227 = vmul.f32 %v223, %v226
    %v228 = vsub.f32 1.0, %v227
    %v229 = vmul.f32 %v226, %v228
    %v230 = vadd.f32 %v226, %v229
    %vm231 = vweird.f32 %v223
    %vm232 = vweird.f32 %v226
    %vm233 = vmor %vm231, %vm232
    %v234 = vsel %vm233, %v226, %v230
    %v235 = vand.u32 2147483647, %v223
    %vm236 = vcmp.eq.f32.partialorder %v235, 8.507059e+37
    %v237 = vand.u32 %v223, 2147483648
    %v238 = vor.u32 1.1754944e-38, %v237
    %v239 = vsel %vm236, %v238, %v234
    %v240 = vmul.f32 %v219, %v239
    %v241 = vrcp.pop %v225
    %v242 = vmul.f32 %v225, %v241
    %v243 = vsub.f32 1.0, %v242
    %v244 = vmul.f32 %v241, %v243
    %v245 = vadd.f32 %v241, %v244
    %vm246 = vweird.f32 %v225
    %vm247 = vweird.f32 %v241
    %vm248 = vmor %vm246, %vm247
    %v249 = vsel %vm248, %v241, %v245
    %v250 = vand.u32 2147483647, %v225
    %vm251 = vcmp.eq.f32.partialorder %v250, 8.507059e+37
    %v252 = vand.u32 %v225, 2147483648
    %v253 = vor.u32 1.1754944e-38, %v252
    %v254 = vsel %vm251, %v253, %v249
    %v255 = vmul.f32 %v221, %v254
    %v256 = vld [vmem:[#allocation8] sm:$0xff]
    %v257 = vld [vmem:[#allocation8 + $0x8] sm:$0xff]
    %258 = vmax.xlane.f32.xlu0 %v256
    %v259 = vpop.xlane.xlu0 %258
    %260 = vmax.xlane.f32.xlu0 %v257
    %v261 = vpop.xlane.xlu0 %260
    %v262 = vsub.f32 %v256, %v259
    %v263 = vsub.f32 %v257, %v261
    %v264 = vmul.f32 %v262, 1.442695
    %v265 = vpow.pop %v264
    %v266 = vmul.f32 %v263, 1.442695
    %v267 = vpow.pop %v266
    %268 = vadd.xlane.f32.xlu0 %v265
    %v269 = vpop.xlane.xlu0 %268
    %270 = vadd.xlane.f32.xlu0 %v267
    %v271 = vpop.xlane.xlu0 %270
    %v272 = vrcp.pop %v269
    %v273 = vmul.f32 %v269, %v272
    %v274 = vsub.f32 1.0, %v273
    %v275 = vmul.f32 %v272, %v274
    %v276 = vadd.f32 %v272, %v275
    %vm277 = vweird.f32 %v269
    %vm278 = vweird.f32 %v272
    %vm279 = vmor %vm277, %vm278
    %v280 = vsel %vm279, %v272, %v276
    %v281 = vand.u32 2147483647, %v269
    %vm282 = vcmp.eq.f32.partialorder %v281, 8.507059e+37
    %v283 = vand.u32 %v269, 2147483648
    %v284 = vor.u32 1.1754944e-38, %v283
    %v285 = vsel %vm282, %v284, %v280
    %v286 = vmul.f32 %v265, %v285
    %v287 = vrcp.pop %v271
    %v288 = vmul.f32 %v271, %v287
    %v289 = vsub.f32 1.0, %v288
    %v290 = vmul.f32 %v287, %v289
    %v291 = vadd.f32 %v287, %v290
    %vm292 = vweird.f32 %v271
    %vm293 = vweird.f32 %v287
    %vm294 = vmor %vm292, %vm293
    %v295 = vsel %vm294, %v287, %v291
    %v296 = vand.u32 2147483647, %v271
    %vm297 = vcmp.eq.f32.partialorder %v296, 8.507059e+37
    %v298 = vand.u32 %v271, 2147483648
    %v299 = vor.u32 1.1754944e-38, %v298
    %v300 = vsel %vm297, %v299, %v295
    %v301 = vmul.f32 %v267, %v300
    %v302 = vld [vmem:[#allocation10] sm:$0xff]
    %v303 = vld [vmem:[#allocation10 + $0x8] sm:$0xff]
    %304 = vmax.xlane.f32.xlu0 %v302
    %v305 = vpop.xlane.xlu0 %304
    %306 = vmax.xlane.f32.xlu0 %v303
    %v307 = vpop.xlane.xlu0 %306
    %v308 = vsub.f32 %v302, %v305
    %v309 = vsub.f32 %v303, %v307
    %v310 = vmul.f32 %v308, 1.442695
    %v311 = vpow.pop %v310
    %v312 = vmul.f32 %v309, 1.442695
    %v313 = vpow.pop %v312
    %314 = vadd.xlane.f32.xlu0 %v311
    %v315 = vpop.xlane.xlu0 %314
    %316 = vadd.xlane.f32.xlu0 %v313
    %v317 = vpop.xlane.xlu0 %316
    %v318 = vrcp.pop %v315
    %v319 = vmul.f32 %v315, %v318
    %v320 = vsub.f32 1.0, %v319
    %v321 = vmul.f32 %v318, %v320
    %v322 = vadd.f32 %v318, %v321
    %vm323 = vweird.f32 %v315
    %vm324 = vweird.f32 %v318
    %vm325 = vmor %vm323, %vm324
    %v326 = vsel %vm325, %v318, %v322
    %v327 = vand.u32 2147483647, %v315
    %vm328 = vcmp.eq.f32.partialorder %v327, 8.507059e+37
    %v329 = vand.u32 %v315, 2147483648
    %v330 = vor.u32 1.1754944e-38, %v329
    %v331 = vsel %vm328, %v330, %v326
    %v332 = vmul.f32 %v311, %v331
    %v333 = vrcp.pop %v317
    %v334 = vmul.f32 %v317, %v333
    %v335 = vsub.f32 1.0, %v334
    %v336 = vmul.f32 %v333, %v335
    %v337 = vadd.f32 %v333, %v336
    %vm338 = vweird.f32 %v317
    %vm339 = vweird.f32 %v333
    %vm340 = vmor %vm338, %vm339
    %v341 = vsel %vm340, %v333, %v337
    %v342 = vand.u32 2147483647, %v317
    %vm343 = vcmp.eq.f32.partialorder %v342, 8.507059e+37
    %v344 = vand.u32 %v317, 2147483648
    %v345 = vor.u32 1.1754944e-38, %v344
    %v346 = vsel %vm343, %v345, %v341
    %v347 = vmul.f32 %v313, %v346
    %v348 = vpack.c.bf16 %v163, %v148
    %v349 = vpack.c.bf16 %v209, %v194
    %v350 = vpack.c.bf16 %v255, %v240
    %v351 = vpack.c.bf16 %v301, %v286
    %v352 = vpack.c.bf16 %v347, %v332
    %v353 = vld [vmem:[#allocation11] sm:$0xf]
    %v354 = vld [vmem:[#allocation11 + $0x4] sm:$0xf]
    %v355 = vld [vmem:[#allocation11 + $0x8] sm:$0xf]
    %v356 = vld [vmem:[#allocation11 + $0xc] sm:$0xf]
    %v357 = vld [vmem:[#allocation11 + $0x10] sm:$0xf]
    %v358 = vld [vmem:[#allocation11 + $0x14] sm:$0xf]
    %v359 = vld [vmem:[#allocation11 + $0x18] sm:$0xf]
    %v360 = vld [vmem:[#allocation11 + $0x1c] sm:$0xf]
    %v361 = vld [vmem:[#allocation11 + $0x20] sm:$0xf]
    %v362 = vld [vmem:[#allocation11 + $0x24] sm:$0xf]
    %v363 = vld [vmem:[#allocation11 + $0x28] sm:$0xf]
    %v364 = vld [vmem:[#allocation11 + $0x2c] sm:$0xf]
    %v365 = vld [vmem:[#allocation11 + $0x30] sm:$0xf]
    %v366 = vld [vmem:[#allocation11 + $0x34] sm:$0xf]
    %v367 = vld [vmem:[#allocation11 + $0x38] sm:$0xf]
    %v368 = vld [vmem:[#allocation11 + $0x3c] sm:$0xf]
    %v369 = vld [vmem:[#allocation11 + $0x40] sm:$0xf]
    %v370 = vld [vmem:[#allocation11 + $0x44] sm:$0xf]
    %v371 = vld [vmem:[#allocation11 + $0x48] sm:$0xf]
    %v372 = vld [vmem:[#allocation11 + $0x4c] sm:$0xf]
    %v373 = vld [vmem:[#allocation11 + $0x50] sm:$0xf]
    %v374 = vld [vmem:[#allocation11 + $0x54] sm:$0xf]
    %v375 = vld [vmem:[#allocation11 + $0x58] sm:$0xf]
    %v376 = vld [vmem:[#allocation11 + $0x5c] sm:$0xf]
    %v377 = vld [vmem:[#allocation11 + $0x60] sm:$0xf]
    %v378 = vld [vmem:[#allocation11 + $0x64] sm:$0xf]
    %v379 = vld [vmem:[#allocation11 + $0x68] sm:$0xf]
    %v380 = vld [vmem:[#allocation11 + $0x6c] sm:$0xf]
    %v381 = vld [vmem:[#allocation11 + $0x70] sm:$0xf]
    %v382 = vld [vmem:[#allocation11 + $0x74] sm:$0xf]
    %v383 = vld [vmem:[#allocation11 + $0x78] sm:$0xf]
    %v384 = vld [vmem:[#allocation11 + $0x7c] sm:$0xf]
    %v385 = vld [vmem:[#allocation11 + $0x80] sm:$0xf]
    %v386 = vld [vmem:[#allocation11 + $0x84] sm:$0xf]
    %v387 = vld [vmem:[#allocation11 + $0x88] sm:$0xf]
    %v388 = vld [vmem:[#allocation11 + $0x8c] sm:$0xf]
    %v389 = vld [vmem:[#allocation11 + $0x90] sm:$0xf]
    %v390 = vld [vmem:[#allocation11 + $0x94] sm:$0xf]
    %v391 = vld [vmem:[#allocation11 + $0x98] sm:$0xf]
    %v392 = vld [vmem:[#allocation11 + $0x9c] sm:$0xf]
    %v393 = vld [vmem:[#allocation11 + $0xa0] sm:$0xf]
    %v394 = vld [vmem:[#allocation11 + $0xa4] sm:$0xf]
    %v395 = vld [vmem:[#allocation11 + $0xa8] sm:$0xf]
    %v396 = vld [vmem:[#allocation11 + $0xac] sm:$0xf]
    %v397 = vld [vmem:[#allocation11 + $0xb0] sm:$0xf]
    %v398 = vld [vmem:[#allocation11 + $0xb4] sm:$0xf]
    %v399 = vld [vmem:[#allocation11 + $0xb8] sm:$0xf]
    %v400 = vld [vmem:[#allocation11 + $0xbc] sm:$0xf]
    %v401 = vld [vmem:[#allocation11 + $0xc0] sm:$0xf]
    %v402 = vld [vmem:[#allocation11 + $0xc4] sm:$0xf]
    %v403 = vld [vmem:[#allocation11 + $0xc8] sm:$0xf]
    %v404 = vld [vmem:[#allocation11 + $0xcc] sm:$0xf]
    %v405 = vld [vmem:[#allocation11 + $0xd0] sm:$0xf]
    %v406 = vld [vmem:[#allocation11 + $0xd4] sm:$0xf]
    %v407 = vld [vmem:[#allocation11 + $0xd8] sm:$0xf]
    %v408 = vld [vmem:[#allocation11 + $0xdc] sm:$0xf]
    %v409 = vld [vmem:[#allocation11 + $0xe0] sm:$0xf]
    %v410 = vld [vmem:[#allocation11 + $0xe4] sm:$0xf]
    %v411 = vld [vmem:[#allocation11 + $0xe8] sm:$0xf]
    %v412 = vld [vmem:[#allocation11 + $0xec] sm:$0xf]
    %v413 = vld [vmem:[#allocation11 + $0xf0] sm:$0xf]
    %v414 = vld [vmem:[#allocation11 + $0xf4] sm:$0xf]
    %v415 = vld [vmem:[#allocation11 + $0xf8] sm:$0xf]
    %v416 = vld [vmem:[#allocation11 + $0xfc] sm:$0xf]
    %v417 = vld [vmem:[#allocation11 + $0x100] sm:$0xf]
    %v418 = vld [vmem:[#allocation11 + $0x104] sm:$0xf]
    %v419 = vld [vmem:[#allocation11 + $0x108] sm:$0xf]
    %v420 = vld [vmem:[#allocation11 + $0x10c] sm:$0xf]
    %v421 = vld [vmem:[#allocation11 + $0x110] sm:$0xf]
    %v422 = vld [vmem:[#allocation11 + $0x114] sm:$0xf]
    %v423 = vld [vmem:[#allocation11 + $0x118] sm:$0xf]
    %v424 = vld [vmem:[#allocation11 + $0x11c] sm:$0xf]
    %v425 = vld [vmem:[#allocation11 + $0x120] sm:$0xf]
    %v426 = vld [vmem:[#allocation11 + $0x124] sm:$0xf]
    %v427 = vld [vmem:[#allocation11 + $0x128] sm:$0xf]
    %v428 = vld [vmem:[#allocation11 + $0x12c] sm:$0xf]
    %v429 = vld [vmem:[#allocation11 + $0x130] sm:$0xf]
    %v430 = vld [vmem:[#allocation11 + $0x134] sm:$0xf]
    %v431 = vld [vmem:[#allocation11 + $0x138] sm:$0xf]
    %v432 = vld [vmem:[#allocation11 + $0x13c] sm:$0xf]
    %v513 = vunpack.c.l.b16 %v353
    %v514 = vunpack.c.l.b16 %v354
    %v515 = vunpack.c.l.b16 %v355
    %v516 = vunpack.c.l.b16 %v356
    %v517 = vunpack.c.l.b16 %v357
    %v518 = vunpack.c.l.b16 %v358
    %v519 = vunpack.c.l.b16 %v359
    %v520 = vunpack.c.l.b16 %v360
    %v521 = vunpack.c.l.b16 %v361
    %v522 = vunpack.c.l.b16 %v362
    %v523 = vunpack.c.l.b16 %v363
    %v524 = vunpack.c.l.b16 %v364
    %v525 = vunpack.c.l.b16 %v365
    %v526 = vunpack.c.l.b16 %v366
    %v527 = vunpack.c.l.b16 %v367
    %v528 = vunpack.c.l.b16 %v368
    %v529 = vunpack.c.l.b16 %v369
    %v530 = vunpack.c.l.b16 %v370
    %v531 = vunpack.c.l.b16 %v371
    %v532 = vunpack.c.l.b16 %v372
    %v533 = vunpack.c.l.b16 %v373
    %v534 = vunpack.c.l.b16 %v374
    %v535 = vunpack.c.l.b16 %v375
    %v536 = vunpack.c.l.b16 %v376
    %v537 = vunpack.c.l.b16 %v377
    %v538 = vunpack.c.l.b16 %v378
    %v539 = vunpack.c.l.b16 %v379
    %v540 = vunpack.c.l.b16 %v380
    %v541 = vunpack.c.l.b16 %v381
    %v542 = vunpack.c.l.b16 %v382
    %v543 = vunpack.c.l.b16 %v383
    %v544 = vunpack.c.l.b16 %v384
    %v545 = vunpack.c.l.b16 %v385
    %v546 = vunpack.c.l.b16 %v386
    %v547 = vunpack.c.l.b16 %v387
    %v548 = vunpack.c.l.b16 %v388
    %v549 = vunpack.c.l.b16 %v389
    %v550 = vunpack.c.l.b16 %v390
    %v551 = vunpack.c.l.b16 %v391
    %v552 = vunpack.c.l.b16 %v392
    %v553 = vunpack.c.l.b16 %v393
    %v554 = vunpack.c.l.b16 %v394
    %v555 = vunpack.c.l.b16 %v395
    %v556 = vunpack.c.l.b16 %v396
    %v557 = vunpack.c.l.b16 %v397
    %v558 = vunpack.c.l.b16 %v398
    %v559 = vunpack.c.l.b16 %v399
    %v560 = vunpack.c.l.b16 %v400
    %v561 = vunpack.c.l.b16 %v401
    %v562 = vunpack.c.l.b16 %v402
    %v563 = vunpack.c.l.b16 %v403
    %v564 = vunpack.c.l.b16 %v404
    %v565 = vunpack.c.l.b16 %v405
    %v566 = vunpack.c.l.b16 %v406
    %v567 = vunpack.c.l.b16 %v407
    %v568 = vunpack.c.l.b16 %v408
    %v569 = vunpack.c.l.b16 %v409
    %v570 = vunpack.c.l.b16 %v410
    %v571 = vunpack.c.l.b16 %v411
    %v572 = vunpack.c.l.b16 %v412
    %v573 = vunpack.c.l.b16 %v413
    %v574 = vunpack.c.l.b16 %v414
    %v575 = vunpack.c.l.b16 %v415
    %v576 = vunpack.c.l.b16 %v416
    %v577 = vunpack.c.l.b16 %v417
    %v578 = vunpack.c.l.b16 %v418
    %v579 = vunpack.c.l.b16 %v419
    %v580 = vunpack.c.l.b16 %v420
    %v581 = vunpack.c.l.b16 %v421
    %v582 = vunpack.c.l.b16 %v422
    %v583 = vunpack.c.l.b16 %v423
    %v584 = vunpack.c.l.b16 %v424
    %v585 = vunpack.c.l.b16 %v425
    %v586 = vunpack.c.l.b16 %v426
    %v587 = vunpack.c.l.b16 %v427
    %v588 = vunpack.c.l.b16 %v428
    %v589 = vunpack.c.l.b16 %v429
    %v590 = vunpack.c.l.b16 %v430
    %v591 = vunpack.c.l.b16 %v431
    %v592 = vunpack.c.l.b16 %v432
    %v593 = vpack.c.b16 %v514, %v513
    %v594 = vpack.c.b16 %v516, %v515
    %v595 = vpack.c.b16 %v518, %v517
    %v596 = vpack.c.b16 %v520, %v519
    %v597 = vpack.c.b16 %v522, %v521
    %v598 = vpack.c.b16 %v524, %v523
    %v599 = vpack.c.b16 %v526, %v525
    %v600 = vpack.c.b16 %v528, %v527
    %v601 = vpack.c.b16 %v530, %v529
    %v602 = vpack.c.b16 %v532, %v531
    %v603 = vpack.c.b16 %v534, %v533
    %v604 = vpack.c.b16 %v536, %v535
    %v605 = vpack.c.b16 %v538, %v537
    %v606 = vpack.c.b16 %v540, %v539
    %v607 = vpack.c.b16 %v542, %v541
    %v608 = vpack.c.b16 %v544, %v543
    %v609 = vpack.c.b16 %v546, %v545
    %v610 = vpack.c.b16 %v548, %v547
    %v611 = vpack.c.b16 %v550, %v549
    %v612 = vpack.c.b16 %v552, %v551
    %v613 = vpack.c.b16 %v554, %v553
    %v614 = vpack.c.b16 %v556, %v555
    %v615 = vpack.c.b16 %v558, %v557
    %v616 = vpack.c.b16 %v560, %v559
    %v617 = vpack.c.b16 %v562, %v561
    %v618 = vpack.c.b16 %v564, %v563
    %v619 = vpack.c.b16 %v566, %v565
    %v620 = vpack.c.b16 %v568, %v567
    %v621 = vpack.c.b16 %v570, %v569
    %v622 = vpack.c.b16 %v572, %v571
    %v623 = vpack.c.b16 %v574, %v573
    %v624 = vpack.c.b16 %v576, %v575
    %v625 = vpack.c.b16 %v578, %v577
    %v626 = vpack.c.b16 %v580, %v579
    %v627 = vpack.c.b16 %v582, %v581
    %v628 = vpack.c.b16 %v584, %v583
    %v629 = vpack.c.b16 %v586, %v585
    %v630 = vpack.c.b16 %v588, %v587
    %v631 = vpack.c.b16 %v590, %v589
    %v632 = vpack.c.b16 %v592, %v591
    %673 = vmatpush.bf16.msra.mxu0 %v600
    %674 = vmatpush.bf16.msra.mxu0 %v599
    %675 = vmatpush.bf16.msra.mxu0 %v598
    %676 = vmatpush.bf16.msra.mxu0 %v597
    %677 = vmatpush.bf16.msra.mxu0 %v596
    %678 = vmatpush.bf16.msra.mxu0 %v595
    %679 = vmatpush.bf16.msra.mxu0 %v594
    %680 = vmatpush.bf16.msra.mxu0 %v593
    %681 = vmatmul.bf16.gmra.mxu0 %v348
    %v682 = vpop.f32.mrf.mxu0
    %v683 = vadd.f32 0.0, %v682
    %v684 = vpop.f32.mrf.mxu0
    %v685 = vadd.f32 0.0, %v684
    %686 = vdwg.mxu0
    %687 = vmatpush.bf16.msra.mxu0 %v608
    %688 = vmatpush.bf16.msra.mxu0 %v607
    %689 = vmatpush.bf16.msra.mxu0 %v606
    %690 = vmatpush.bf16.msra.mxu0 %v605
    %691 = vmatpush.bf16.msra.mxu0 %v604
    %692 = vmatpush.bf16.msra.mxu0 %v603
    %693 = vmatpush.bf16.msra.mxu0 %v602
    %694 = vmatpush.bf16.msra.mxu0 %v601
    %695 = vmatmul.bf16.gmra.mxu0 %v349
    %v696 = vpop.f32.mrf.mxu0
    %v697 = vadd.f32 %v683, %v696
    %v698 = vpop.f32.mrf.mxu0
    %v699 = vadd.f32 %v685, %v698
    %700 = vdwg.mxu0
    %701 = vmatpush.bf16.msra.mxu0 %v616
    %702 = vmatpush.bf16.msra.mxu0 %v615
    %703 = vmatpush.bf16.msra.mxu0 %v614
    %704 = vmatpush.bf16.msra.mxu0 %v613
    %705 = vmatpush.bf16.msra.mxu0 %v612
    %706 = vmatpush.bf16.msra.mxu0 %v611
    %707 = vmatpush.bf16.msra.mxu0 %v610
    %708 = vmatpush.bf16.msra.mxu0 %v609
    %709 = vmatmul.bf16.gmra.mxu0 %v350
    %v710 = vpop.f32.mrf.mxu0
    %v711 = vadd.f32 %v697, %v710
    %v712 = vpop.f32.mrf.mxu0
    %v713 = vadd.f32 %v699, %v712
    %714 = vdwg.mxu0
    %715 = vmatpush.bf16.msra.mxu0 %v624
    %716 = vmatpush.bf16.msra.mxu0 %v623
    %717 = vmatpush.bf16.msra.mxu0 %v622
    %718 = vmatpush.bf16.msra.mxu0 %v621
    %719 = vmatpush.bf16.msra.mxu0 %v620
    %720 = vmatpush.bf16.msra.mxu0 %v619
    %721 = vmatpush.bf16.msra.mxu0 %v618
    %722 = vmatpush.bf16.msra.mxu0 %v617
    %723 = vmatmul.bf16.gmra.mxu0 %v351
    %v724 = vpop.f32.mrf.mxu0
    %v725 = vadd.f32 %v711, %v724
    %v726 = vpop.f32.mrf.mxu0
    %v727 = vadd.f32 %v713, %v726
    %728 = vdwg.mxu0
    %729 = vmatpush.bf16.msra.mxu0 %v632
    %730 = vmatpush.bf16.msra.mxu0 %v631
    %731 = vmatpush.bf16.msra.mxu0 %v630
    %732 = vmatpush.bf16.msra.mxu0 %v629
    %733 = vmatpush.bf16.msra.mxu0 %v628
    %734 = vmatpush.bf16.msra.mxu0 %v627
    %735 = vmatpush.bf16.msra.mxu0 %v626
    %736 = vmatpush.bf16.msra.mxu0 %v625
    %737 = vmatmul.bf16.gmra.mxu0 %v352
    %v738 = vpop.f32.mrf.mxu0
    %v739 = vadd.f32 %v725, %v738
    %v740 = vpop.f32.mrf.mxu0
    %v741 = vadd.f32 %v727, %v740
    %742 = vdwg.mxu0
    %v743 = vsub.f32 0.0, %v739
    %v744 = vsub.f32 0.0, %v741
    %745 = vst [vmem:[#allocation13] sm:$0xff] %v743
    %746 = vst [vmem:[#allocation13 + $0x8] sm:$0xff] %v744
    // Predicated region
    $region50: #{tpu_custom_call.1} parent=1 // pred_check
      _
    $region51: #{tpu_custom_call.1} parent=1 // pred_check_branch
      %748 = sbr.rel (0) target = $region53
    $region52: #{tpu_custom_call.1} parent=1 // pred_region
      %750 = vsyncadd [#allocation4], 0
      %s751 = sshll.u32 [#allocation13], 4
      %s752 = int_to_ptr.vmem [resolvable:$true] %s751
      %s753 = sshll.u32 %s6, 4
      %s754 = int_to_ptr.hbm [resolvable:$true] %s753
      %759 = dma.vmem_to_hbm [thread:$0]  %s752, 256, %s754, [#allocation4], 128, 128, 8
    $region53: #{tpu_custom_call.1} parent=1 // pred_fallthru
      _
    // Predicated region
    $region54: #{tpu_custom_call.1} parent=1 // pred_check
      _
    $region55: #{tpu_custom_call.1} parent=1 // pred_check_branch
      %761 = sbr.rel (0) target = $region57
    $region56: #{tpu_custom_call.1} parent=1 // pred_region
      %763 = dma.done [#allocation4], 256
    $region57: #{tpu_custom_call.1} parent=1 // pred_fallthru
      _
    %764 = vsyncpa [#allocation3], 1
    %765 = vsyncpa [#allocation6], 1
    %766 = vsyncpa [#allocation9], 1
    %767 = vsyncpa [#allocation12], 1
    %768 = vsyncpa [#allocation4], 1

</llo_original>
